<compile_context>
chip_gen: v7x
topology: tpu7x:2x2x1
jax: 0.10.0
libtpu: 0.0.40
codegen_flags: <defaults>
</compile_context>

<pallas_src>
import functools

import jax
import jax.numpy as jnp
from jax.experimental import pallas as pl
from jax.experimental.pallas import tpu as pltpu


def _vid_loss_kernel(x_ref, y_ref, o_ref, *, seg_cols, segs_per_block,
                     chunks_per_frame, inv_norm):
    """One (tile_bc, segs_per_block*seg_cols) block of the (B*C, T*H*W) arrays.

    Every `seg_cols`-wide segment lies entirely inside one frame, so its loss
    weight is a single scalar computed on the scalar unit from the grid
    position -- no vector iota, no vector integer divide, no per-element
    weight multiply, and no full-block accumulator in VMEM.
    """
    c = pl.program_id(1)
    first_seg = c * segs_per_block

    total = jnp.zeros((), jnp.float32)
    for s in range(segs_per_block):              # static unroll (small, capped)
        lo = s * seg_cols                        # 128-aligned static offset
        xd = x_ref[:, lo:lo + seg_cols].astype(jnp.float32)
        yd = y_ref[:, lo:lo + seg_cols].astype(jnp.float32)
        d = xd - yd
        # Lane-preserving vreg fold (VPU) + one small cross-lane reduce (XLU).
        seg_sum = jnp.sum(d * d)
        seg = first_seg + s
        frame = seg if chunks_per_frame == 1 else seg // chunks_per_frame
        w = (frame + 1).astype(jnp.float32) * inv_norm   # scalar-unit weight
        total = total + w * seg_sum

    o_ref[...] = total.reshape(1, 1, 1, 1)


def _largest_divisor(n, quantum, cap):
    """Largest d with d % quantum == 0, n % d == 0 and d <= cap (>= quantum)."""
    best = quantum
    for d in range(quantum, min(n, max(cap, quantum)) + 1, quantum):
        if n % d == 0:
            best = d
    return best


# Per-inner-segment f32-intermediate cap (elements): keeps the diff/square
# temporaries around ~128 KiB so register pressure / spill stays low.
_SEG_ELEM_CAP = 32 * 1024
# Cap on the statically unrolled inner segment loop (code size / compile time).
_MAX_INNER_SEGS = 32


def _vmem_capacity_bytes():
    try:
        return int(pltpu.get_tpu_info().vmem_capacity_bytes)
    except Exception:
        return 64 * 1024 * 1024        # conservative (v7x per-TC VMEM)


def vid_loss(x_seq, y_seq, w_type="linear"):
    """Pallas VidLoss forward: loss_func = MSE (mean), w_type = 'linear'."""
    assert w_type == "linear"
    assert x_seq.shape == y_seq.shape
    assert x_seq.shape[2] == y_seq.shape[2]
    B, C, T, H, W = x_seq.shape
    BC, HW = B * C, H * W
    # TODO(synk): pad/mask instead of asserting so non-(8,128)-aligned shapes
    # (e.g. C=3, odd H*W) are accepted.
    assert HW % 128 == 0, "H*W must be a multiple of 128 lanes"
    assert BC % 8 == 0, "B*C must be a multiple of 8 sublanes"

    itemsize = jnp.dtype(x_seq.dtype).itemsize

    # Generation-aware per-input, per-pipeline-buffer block budget:
    #   v5e/v6e (128 MiB VMEM): ~5 MiB blocks to sit near the HBM roofline.
    #   v7x     ( 64 MiB VMEM): ~3 MiB keeps 2 inputs x 2 buffers well clear.
    vmem_cap = _vmem_capacity_bytes()
    budget = (5 << 20) if vmem_cap >= (96 << 20) else (3 << 20)

    # Rows per block: multiple of 8 dividing BC; cap at BC//2 when possible so
    # there are >= 2 row tiles for v7x megacore to split.
    row_cap = BC // 2 if BC >= 16 else BC
    row_cap = min(row_cap, max(8, budget // (128 * itemsize)))
    tile_bc = _largest_divisor(BC, 8, row_cap)
    n_row_tiles = BC // tile_bc

    # Columns per block = whole segments; each segment lies inside one frame.
    col_budget = max(128, budget // (tile_bc * itemsize))
    seg_cols_cap = min(HW, col_budget, max(128, _SEG_ELEM_CAP // tile_bc))
    seg_cols = _largest_divisor(HW, 128, seg_cols_cap)
    chunks_per_frame = HW // seg_cols

    total_segs = T * chunks_per_frame
    segs_cap = min(total_segs, col_budget // seg_cols, _MAX_INNER_SEGS)
    if n_row_tiles == 1 and total_segs >= 2:
        # Keep >= 2 grid tiles overall so both v7x TensorCores get work.
        segs_cap = min(segs_cap, total_segs // 2)
    segs_per_block = _largest_divisor(total_segs, 1, max(1, segs_cap))
    tile_cols = segs_per_block * seg_cols
    n_col_tiles = total_segs // segs_per_block

    # Free reshapes: the merged axes are already contiguous in NCTHW layout.
    xf = x_seq.reshape(BC, T * HW)
    yf = y_seq.reshape(BC, T * HW)

    # Folds the MSE 1/N and the linear-weight denominator into one constant:
    #   w_t / N = 2*(t+1) / ((T + T^2) * B*C*H*W)
    inv_norm = 2.0 / float((T + T * T) * (BC * HW))

    kernel = functools.partial(
        _vid_loss_kernel, seg_cols=seg_cols, segs_per_block=segs_per_block,
        chunks_per_frame=chunks_per_frame, inv_norm=inv_norm)

    # Scoped-VMEM limit sized from the real footprint (2 inputs x 2 pipeline
    # buffers + in-kernel f32 temporaries) with headroom, capped at physical.
    tile_bytes = tile_bc * tile_cols * itemsize
    footprint = 2 * 2 * tile_bytes + 4 * tile_bc * seg_cols * 4 + (4 << 20)
    vmem_limit = int(min(vmem_cap, max(footprint, 16 << 20)))

    partials = pl.pallas_call(
        kernel,
        out_shape=jax.ShapeDtypeStruct((n_row_tiles, n_col_tiles, 1, 1),
                                       jnp.float32),
        grid=(n_row_tiles, n_col_tiles),
        in_specs=[
            # TODO(synk): add pipeline_mode=pl.Buffered(3) here if xprof shows
            # exposed DMA at tile boundaries (footprint still fits v7x budget).
            pl.BlockSpec((tile_bc, tile_cols), lambda r, c: (r, c)),
            pl.BlockSpec((tile_bc, tile_cols), lambda r, c: (r, c)),
        ],
        out_specs=pl.BlockSpec((1, 1, 1, 1), lambda r, c: (r, c, 0, 0)),
        compiler_params=pltpu.CompilerParams(
            # Every (r, c) block writes its own partial, so both grid axes are
            # fully parallel and v7x megacore can balance over either axis.
            dimension_semantics=("parallel", "parallel"),
            vmem_limit_bytes=vmem_limit,
        ),
    )(xf, yf)

    # Tiny final reduction over n_row_tiles * n_col_tiles f32 partials.
    return jnp.sum(partials)


def vid_loss_ref(x_seq, y_seq):
    """Pure-JAX reference matching the PyTorch forward with MSELoss()."""
    T = x_seq.shape[2]
    weights = [i * 2.0 / (T + T**2) for i in range(1, T + 1)]
    loss = 0.0
    for i in range(T):
        d = x_seq[:, :, i].astype(jnp.float32) - y_seq[:, :, i].astype(jnp.float32)
        loss += weights[i] * jnp.mean(d * d)
    return loss


if __name__ == "__main__":
    key = jax.random.PRNGKey(0)
    kx, ky = jax.random.split(key)
    # (B, C, T, H, W) = (2, 4, 8, 16, 16)
    x = jax.random.normal(kx, (2, 4, 8, 16, 16), dtype=jnp.float32)
    y = jax.random.normal(ky, (2, 4, 8, 16, 16), dtype=jnp.float32)

    loss = jax.block_until_ready(vid_loss(x, y))
    ref = jax.block_until_ready(vid_loss_ref(x, y))
    assert jnp.allclose(loss, ref, rtol=1e-4, atol=1e-5), (loss, ref)

    # bf16 path: ~2x less HBM traffic for this bandwidth-bound op on v5e/v6e;
    # accumulation inside the kernel stays f32.
    xb, yb = x.astype(jnp.bfloat16), y.astype(jnp.bfloat16)
    loss_bf16 = jax.block_until_ready(vid_loss(xb, yb))
    ref_bf16 = jax.block_until_ready(vid_loss_ref(xb, yb))
    assert jnp.allclose(loss_bf16, ref_bf16, rtol=5e-2, atol=5e-2), (loss_bf16, ref_bf16)

    print("KERNEL_OK")
</pallas_src>

<mosaic_0001>
module attributes {stable_mosaic.version = 11 : i64} {
  func.func @_vid_loss_kernel(%arg0: i32, %arg1: i32, %arg2: memref<8x1024xf32, #tpu.memory_space<vmem>>, %arg3: memref<8x1024xf32, #tpu.memory_space<vmem>>, %arg4: memref<1x1x1x1xf32, #tpu.memory_space<vmem>>) attributes {dimension_semantics = [#tpu.dimension_semantics<parallel>, #tpu.dimension_semantics<parallel>], iteration_bounds = array<i64: 1, 2>, scalar_prefetch = 0 : i64, scratch_operands = 0 : i64, tpu.core_type = #tpu.core_type<tc>, window_params = [{transform_indices = @transform_0, window_bounds = array<i64: 8, 1024>}, {transform_indices = @transform_1, window_bounds = array<i64: 8, 1024>}, {transform_indices = @transform_2, window_bounds = array<i64: 1, 1, 1, 1>}]} {
    %c4_i32 = arith.constant 4 : i32
    %0 = arith.muli %arg1, %c4_i32 : i32
    %c0 = arith.constant 0 : index
    %c0_0 = arith.constant 0 : index
    %1 = vector.load %arg2[%c0, %c0_0] : memref<8x1024xf32, #tpu.memory_space<vmem>>, vector<8x256xf32>
    %c0_1 = arith.constant 0 : index
    %c0_2 = arith.constant 0 : index
    %2 = vector.load %arg3[%c0_1, %c0_2] : memref<8x1024xf32, #tpu.memory_space<vmem>>, vector<8x256xf32>
    %3 = arith.subf %1, %2 : vector<8x256xf32>
    %4 = arith.mulf %3, %3 : vector<8x256xf32>
    %5 = vector.shape_cast %4 : vector<8x256xf32> to vector<1x8x256xf32>
    %cst = arith.constant dense<0.000000e+00> : vector<1xf32>
    %6 = vector.multi_reduction <add>, %5, %cst [1, 2] : vector<1x8x256xf32> to vector<1xf32>
    %7 = vector.shape_cast %6 : vector<1xf32> to vector<1x1x1xf32>
    %8 = vector.extract %7[0, 0, 0] : f32 from vector<1x1x1xf32>
    %c0_i32 = arith.constant 0 : i32
    %9 = arith.addi %0, %c0_i32 : i32
    %c1_i32 = arith.constant 1 : i32
    %10 = arith.addi %9, %c1_i32 : i32
    %11 = arith.sitofp %10 : i32 to f32
    %cst_3 = arith.constant 1.35633682E-5 : f32
    %12 = arith.mulf %11, %cst_3 : f32
    %13 = arith.mulf %12, %8 : f32
    %cst_4 = arith.constant 0.000000e+00 : f32
    %14 = arith.addf %cst_4, %13 : f32
    %c0_5 = arith.constant 0 : index
    %c256 = arith.constant 256 : index
    %15 = vector.load %arg2[%c0_5, %c256] : memref<8x1024xf32, #tpu.memory_space<vmem>>, vector<8x256xf32>
    %c0_6 = arith.constant 0 : index
    %c256_7 = arith.constant 256 : index
    %16 = vector.load %arg3[%c0_6, %c256_7] : memref<8x1024xf32, #tpu.memory_space<vmem>>, vector<8x256xf32>
    %17 = arith.subf %15, %16 : vector<8x256xf32>
    %18 = arith.mulf %17, %17 : vector<8x256xf32>
    %19 = vector.shape_cast %18 : vector<8x256xf32> to vector<1x8x256xf32>
    %cst_8 = arith.constant dense<0.000000e+00> : vector<1xf32>
    %20 = vector.multi_reduction <add>, %19, %cst_8 [1, 2] : vector<1x8x256xf32> to vector<1xf32>
    %21 = vector.shape_cast %20 : vector<1xf32> to vector<1x1x1xf32>
    %22 = vector.extract %21[0, 0, 0] : f32 from vector<1x1x1xf32>
    %c1_i32_9 = arith.constant 1 : i32
    %23 = arith.addi %0, %c1_i32_9 : i32
    %c1_i32_10 = arith.constant 1 : i32
    %24 = arith.addi %23, %c1_i32_10 : i32
    %25 = arith.sitofp %24 : i32 to f32
    %cst_11 = arith.constant 1.35633682E-5 : f32
    %26 = arith.mulf %25, %cst_11 : f32
    %27 = arith.mulf %26, %22 : f32
    %28 = arith.addf %14, %27 : f32
    %c0_12 = arith.constant 0 : index
    %c512 = arith.constant 512 : index
    %29 = vector.load %arg2[%c0_12, %c512] : memref<8x1024xf32, #tpu.memory_space<vmem>>, vector<8x256xf32>
    %c0_13 = arith.constant 0 : index
    %c512_14 = arith.constant 512 : index
    %30 = vector.load %arg3[%c0_13, %c512_14] : memref<8x1024xf32, #tpu.memory_space<vmem>>, vector<8x256xf32>
    %31 = arith.subf %29, %30 : vector<8x256xf32>
    %32 = arith.mulf %31, %31 : vector<8x256xf32>
    %33 = vector.shape_cast %32 : vector<8x256xf32> to vector<1x8x256xf32>
    %cst_15 = arith.constant dense<0.000000e+00> : vector<1xf32>
    %34 = vector.multi_reduction <add>, %33, %cst_15 [1, 2] : vector<1x8x256xf32> to vector<1xf32>
    %35 = vector.shape_cast %34 : vector<1xf32> to vector<1x1x1xf32>
    %36 = vector.extract %35[0, 0, 0] : f32 from vector<1x1x1xf32>
    %c2_i32 = arith.constant 2 : i32
    %37 = arith.addi %0, %c2_i32 : i32
    %c1_i32_16 = arith.constant 1 : i32
    %38 = arith.addi %37, %c1_i32_16 : i32
    %39 = arith.sitofp %38 : i32 to f32
    %cst_17 = arith.constant 1.35633682E-5 : f32
    %40 = arith.mulf %39, %cst_17 : f32
    %41 = arith.mulf %40, %36 : f32
    %42 = arith.addf %28, %41 : f32
    %c0_18 = arith.constant 0 : index
    %c768 = arith.constant 768 : index
    %43 = vector.load %arg2[%c0_18, %c768] : memref<8x1024xf32, #tpu.memory_space<vmem>>, vector<8x256xf32>
    %c0_19 = arith.constant 0 : index
    %c768_20 = arith.constant 768 : index
    %44 = vector.load %arg3[%c0_19, %c768_20] : memref<8x1024xf32, #tpu.memory_space<vmem>>, vector<8x256xf32>
    %45 = arith.subf %43, %44 : vector<8x256xf32>
    %46 = arith.mulf %45, %45 : vector<8x256xf32>
    %47 = vector.shape_cast %46 : vector<8x256xf32> to vector<1x8x256xf32>
    %cst_21 = arith.constant dense<0.000000e+00> : vector<1xf32>
    %48 = vector.multi_reduction <add>, %47, %cst_21 [1, 2] : vector<1x8x256xf32> to vector<1xf32>
    %49 = vector.shape_cast %48 : vector<1xf32> to vector<1x1x1xf32>
    %50 = vector.extract %49[0, 0, 0] : f32 from vector<1x1x1xf32>
    %c3_i32 = arith.constant 3 : i32
    %51 = arith.addi %0, %c3_i32 : i32
    %c1_i32_22 = arith.constant 1 : i32
    %52 = arith.addi %51, %c1_i32_22 : i32
    %53 = arith.sitofp %52 : i32 to f32
    %cst_23 = arith.constant 1.35633682E-5 : f32
    %54 = arith.mulf %53, %cst_23 : f32
    %55 = arith.mulf %54, %50 : f32
    %56 = arith.addf %42, %55 : f32
    %57 = vector.broadcast %56 : f32 to vector<1x1x1x1xf32>
    %c0_24 = arith.constant 0 : index
    %c0_25 = arith.constant 0 : index
    %c0_26 = arith.constant 0 : index
    %c0_27 = arith.constant 0 : index
    %58 = vector.load %arg4[%c0_24, %c0_25, %c0_26, %c0_27] : memref<1x1x1x1xf32, #tpu.memory_space<vmem>>, vector<1x1x1x1xf32>
    tpu.vector_store %arg4[%c0_24, %c0_25, %c0_26, %c0_27], %57 {strides = array<i32>} : memref<1x1x1x1xf32, #tpu.memory_space<vmem>>, vector<1x1x1x1xf32>,
    return
  }
  func.func @transform_0(%arg0: i32, %arg1: i32) -> (i32, i32) {
    %c0_i32 = arith.constant 0 : i32
    return %arg0, %arg1 : i32, i32
  }
  func.func @transform_1(%arg0: i32, %arg1: i32) -> (i32, i32) {
    %c0_i32 = arith.constant 0 : i32
    return %arg0, %arg1 : i32, i32
  }
  func.func @transform_2(%arg0: i32, %arg1: i32) -> (i32, i32, i32, i32) {
    %c0_i32 = arith.constant 0 : i32
    %c0_i32_0 = arith.constant 0 : i32
    %c0_i32_1 = arith.constant 0 : i32
    return %arg0, %arg1, %c0_i32, %c0_i32_0 : i32, i32, i32, i32
  }
}

</mosaic_0001>

<llo_original>
// kernel: tpu_custom_call.1
$region0: #{tpu_custom_call.1}
  #allocation0 [shape = 'u32[]', space=smem, size = 0x4, offset = 0x4, fixed_abs, tag = 'smem constant byte address 0x4 - core index']
  #allocation1 [shape = 'u32[144,128]{1,0:T(1,128)}', space=vmem, size = 0x12000, scoped, tag = 'internal scratch']
  %s0 = inlined_call_operand.hbm [shape: f32[8,2048], index: 0, kind: input, shape index: {}]
  %s1 = inlined_call_operand.hbm [shape: f32[8,2048], index: 1, kind: input, shape index: {}]
  %s2 = inlined_call_operand.vmem [shape: f32[1,2,1,1], index: 2, kind: output, shape index: {}]
  %s3 = sld [smem:[#allocation0]]
  $region49: #{tpu_custom_call.1} parent=0
    _
  %s5 = ssub.s32 1, %s3
  %s6 = scalar_select 0, %s5, %s3
  $region1: #{tpu_custom_call.1} parent=0
    #allocation2 [shape = 'u8[65536]{0}', space=vmem, size = 0x10000, scoped, tag = 'input window, operand 0']
    #allocation3 [shape = 's32[2]{0}', space=sflag, size = 0x8, scoped, tag = 'scoped memory for tpu_custom_call.1']
    #allocation4 [shape = 'u8[65536]{0}', space=vmem, size = 0x10000, scoped, tag = 'input window, operand 1']
    #allocation5 [shape = 's32[2]{0}', space=sflag, size = 0x8, scoped, tag = 'scoped memory for tpu_custom_call.1']
    %7 = vsyncpa [#allocation3], 0
    %s8 = scalar_lea.sflag [#allocation3], 1
    %9 = vsyncpa %s8, 0
    %10 = vsyncpa [#allocation5], 0
    %s11 = scalar_lea.sflag [#allocation5], 1
    %12 = vsyncpa %s11, 0
    loop: start=0, step=1, limit=4
    $region2: #{tpu_custom_call.1} parent=1 // loop_pre_header
      _
    $region3: #{tpu_custom_call.1} parent=1 // loop_header
      %s14 = sphi 0, %s18
      %p15 = scmp.ge.s32.totalorder %s14, 4
      %s21 = sphi 0, %s33
      %s22 = sphi 0, %s29
      %s23 = sphi 0, %s21
      %s24 = sphi 0, %s22
      %s25 = sphi 0, %s23
      %s26 = sphi 0, %s24
      %s38 = sphi 0, %s40
      %s41 = sphi 0, %s38
      %s42 = sphi 0, %s41
      %s58 = sphi 0, %s42
      %s66 = sphi 0, %s68
      %s69 = sphi 0, %s66
      %s70 = sphi 0, %s69
      %s86 = sphi 0, %s70
      %s94 = sphi 0, %s96
      %s97 = sphi 0, %s94
      %s98 = sphi 0, %s97
      %s114 = sphi 0, %s98
    $region4: #{tpu_custom_call.1} parent=1 // loop_header_branch
      %17 = sbr.rel (%p15) target = $region8
    $region5: #{tpu_custom_call.1} parent=1 // loop_body
      %s19 = ssub.s32 %s14, 1
      %s20 = ssub.s32 %s14, 2
      %s27 = sadd.s32 1, %s22
      %p28 = scmp.ge.s32.totalorder %s27, 2
      %s29 = scalar_select %p28, 0, %s27
      %s30 = sadd.s32 1, %s21
      %s31 = scalar_select %p28, %s30, %s21
      %p32 = scmp.ge.s32.totalorder %s31, 1
      %s33 = scalar_select %p32, 0, %s31
      %s34 = ssub.s32 %s21, %s33
      %s35 = ssub.s32 %s22, %s29
      %s36 = sor.u32 %s34, %s35
      %p37 = scmp.eq.s32.totalorder %s36, 0
      %s39 = sadd.s32 %s38, 1
      %s40 = scalar_select %p37, %s38, %s39
      %p43 = pneg %p37
      %p44 = scmp.eq.s32.totalorder %s14, 1
      %p45 = por %p43, %p44
      %p46 = scmp.ne.s32.totalorder %s38, %s41
      %p47 = scmp.eq.s32.totalorder %s14, 0
      %p48 = por %p46, %p47
      %p49 = scmp.ne.s32.totalorder %s38, %s41
      %p50 = scmp.eq.s32.totalorder %s19, 1
      %p51 = por %p49, %p50
      %p52 = scmp.ne.s32.totalorder %s41, %s42
      %p53 = scmp.eq.s32.totalorder %s19, 0
      %p54 = por %p52, %p53
      %p55 = scmp.ne.s32.totalorder %s41, %s42
      %p56 = scmp.eq.s32.totalorder %s20, 1
      %p57 = por %p55, %p56
      %p59 = scmp.ne.s32.totalorder %s42, %s58
      %p60 = scmp.eq.s32.totalorder %s20, 0
      %p61 = por %p59, %p60
      %s62 = ssub.s32 %s21, %s33
      %s63 = ssub.s32 %s22, %s29
      %s64 = sor.u32 %s62, %s63
      %p65 = scmp.eq.s32.totalorder %s64, 0
      %s67 = sadd.s32 %s66, 1
      %s68 = scalar_select %p65, %s66, %s67
      %p71 = pneg %p65
      %p72 = scmp.eq.s32.totalorder %s14, 1
      %p73 = por %p71, %p72
      %p74 = scmp.ne.s32.totalorder %s66, %s69
      %p75 = scmp.eq.s32.totalorder %s14, 0
      %p76 = por %p74, %p75
      %p77 = scmp.ne.s32.totalorder %s66, %s69
      %p78 = scmp.eq.s32.totalorder %s19, 1
      %p79 = por %p77, %p78
      %p80 = scmp.ne.s32.totalorder %s69, %s70
      %p81 = scmp.eq.s32.totalorder %s19, 0
      %p82 = por %p80, %p81
      %p83 = scmp.ne.s32.totalorder %s69, %s70
      %p84 = scmp.eq.s32.totalorder %s20, 1
      %p85 = por %p83, %p84
      %p87 = scmp.ne.s32.totalorder %s70, %s86
      %p88 = scmp.eq.s32.totalorder %s20, 0
      %p89 = por %p87, %p88
      %s90 = ssub.s32 %s21, %s33
      %s91 = ssub.s32 %s22, %s29
      %s92 = sor.u32 %s90, %s91
      %p93 = scmp.eq.s32.totalorder %s92, 0
      %s95 = sadd.s32 %s94, 1
      %s96 = scalar_select %p93, %s94, %s95
      %p99 = pneg %p93
      %p100 = scmp.eq.s32.totalorder %s14, 1
      %p101 = por %p99, %p100
      %p102 = scmp.ne.s32.totalorder %s94, %s97
      %p103 = scmp.eq.s32.totalorder %s14, 0
      %p104 = por %p102, %p103
      %p105 = scmp.ne.s32.totalorder %s94, %s97
      %p106 = scmp.eq.s32.totalorder %s19, 1
      %p107 = por %p105, %p106
      %p108 = scmp.ne.s32.totalorder %s97, %s98
      %p109 = scmp.eq.s32.totalorder %s19, 0
      %p110 = por %p108, %p109
      %p111 = scmp.ne.s32.totalorder %s97, %s98
      %p112 = scmp.eq.s32.totalorder %s20, 1
      %p113 = por %p111, %p112
      %p115 = scmp.ne.s32.totalorder %s98, %s114
      %p116 = scmp.eq.s32.totalorder %s20, 0
      %p117 = por %p115, %p116
      %p118 = scmp.le.s32.totalorder 1, %s14
      %p119 = scmp.lt.s32.totalorder %s14, 3
      %p120 = pnand %p118, %p119
      %p121 = pneg %p120
      // Predicated region
      $region9: #{tpu_custom_call.1} parent=5 // pred_check
        _
      $region10: #{tpu_custom_call.1} parent=5 // pred_check_branch
        %123 = sbr.rel (%p120) target = $region12
      $region11: #{tpu_custom_call.1} parent=5 // pred_region
        %s124 = ssub.s32 %s14, 1
      $region12: #{tpu_custom_call.1} parent=5 // pred_fallthru
        _
      %p125 = scmp.lt.s32.totalorder %s14, 2
      // Predicated region
      $region13: #{tpu_custom_call.1} parent=5 // pred_check
        %p126 = pneg %p125
      $region14: #{tpu_custom_call.1} parent=5 // pred_check_branch
        %128 = sbr.rel (%p126) target = $region16
      $region15: #{tpu_custom_call.1} parent=5 // pred_region
        // Predicated region
        $region17: #{tpu_custom_call.1} parent=15 // pred_check
          %p129 = pneg %p48
        $region18: #{tpu_custom_call.1} parent=15 // pred_check_branch
          %131 = sbr.rel (%p129) target = $region20
        $region19: #{tpu_custom_call.1} parent=15 // pred_region
          %s132 = sand.u32 %s38, 1
          %s133 = scalar_lea.sflag [#allocation3], %s132
          %s134 = sand.u32 %s38, 1
          %s135 = smul.addr %s134, 64
          %s136 = scalar_lea.vmem [#allocation2], %s135
          %s137 = smul.u32 8, %s22
          %s139 = ssub.s32 1024, 1024
          %140 = vsyncadd %s133, %s139
          %s141 = smul.addr %s21, 16
          %s142 = sadd.s32 %s137, %s141
          %s143 = smul.addr %s142, 128
          %s144 = scalar_lea.hbm %s0, %s143
          %s146 = sshll.u32 %s136, 4
          %s147 = int_to_ptr.vmem [resolvable:$true] %s146
          %149 = dma.hbm_to_vmem [thread:$0]  %s144, 1024, %s147, %s133
        $region20: #{tpu_custom_call.1} parent=15 // pred_fallthru
          _
        // Predicated region
        $region21: #{tpu_custom_call.1} parent=15 // pred_check
          %p150 = pneg %p76
        $region22: #{tpu_custom_call.1} parent=15 // pred_check_branch
          %152 = sbr.rel (%p150) target = $region24
        $region23: #{tpu_custom_call.1} parent=15 // pred_region
          %s153 = sand.u32 %s66, 1
          %s154 = scalar_lea.sflag [#allocation5], %s153
          %s155 = sand.u32 %s66, 1
          %s156 = smul.addr %s155, 64
          %s157 = scalar_lea.vmem [#allocation4], %s156
          %s158 = smul.u32 8, %s22
          %s160 = ssub.s32 1024, 1024
          %161 = vsyncadd %s154, %s160
          %s162 = smul.addr %s21, 16
          %s163 = sadd.s32 %s158, %s162
          %s164 = smul.addr %s163, 128
          %s165 = scalar_lea.hbm %s1, %s164
          %s167 = sshll.u32 %s157, 4
          %s168 = int_to_ptr.vmem [resolvable:$true] %s167
          %170 = dma.hbm_to_vmem [thread:$0]  %s165, 1024, %s168, %s154
        $region24: #{tpu_custom_call.1} parent=15 // pred_fallthru
          _
      $region16: #{tpu_custom_call.1} parent=5 // pred_fallthru
        _
      %p171 = scmp.le.s32.totalorder 1, %s14
      %p172 = scmp.lt.s32.totalorder %s14, 3
      %p173 = pnand %p171, %p172
      %p174 = pneg %p173
      // Predicated region
      $region25: #{tpu_custom_call.1} parent=5 // pred_check
        _
      $region26: #{tpu_custom_call.1} parent=5 // pred_check_branch
        %176 = sbr.rel (%p173) target = $region28
      $region27: #{tpu_custom_call.1} parent=5 // pred_region
        %s177 = ssub.s32 %s14, 1
        %s178 = sand.u32 %s41, 1
        %s179 = scalar_lea.sflag [#allocation3], %s178
        %s180 = sand.u32 %s41, 1
        %s181 = smul.addr %s180, 64
        %s182 = scalar_lea.vmem [#allocation2], %s181
        // Predicated region
        $region29: #{tpu_custom_call.1} parent=27 // pred_check
          %p183 = pneg %p54
        $region30: #{tpu_custom_call.1} parent=27 // pred_check_branch
          %185 = sbr.rel (%p183) target = $region32
        $region31: #{tpu_custom_call.1} parent=27 // pred_region
          %186 = dma.done %s179, 1024
        $region32: #{tpu_custom_call.1} parent=27 // pred_fallthru
          _
        %s187 = sand.u32 %s69, 1
        %s188 = scalar_lea.sflag [#allocation5], %s187
        %s189 = sand.u32 %s69, 1
        %s190 = smul.addr %s189, 64
        %s191 = scalar_lea.vmem [#allocation4], %s190
        // Predicated region
        $region33: #{tpu_custom_call.1} parent=27 // pred_check
          %p192 = pneg %p82
        $region34: #{tpu_custom_call.1} parent=27 // pred_check_branch
          %194 = sbr.rel (%p192) target = $region36
        $region35: #{tpu_custom_call.1} parent=27 // pred_region
          %195 = dma.done %s188, 1024
        $region36: #{tpu_custom_call.1} parent=27 // pred_fallthru
          _
        %s196 = sand.u32 %s41, 1
        %s197 = scalar_lea.sflag [#allocation3], %s196
        %s198 = sand.u32 %s41, 1
        %s199 = smul.addr %s198, 64
        %s200 = scalar_lea.vmem [#allocation2], %s199
        %p201 = pneg %p54
        %p202 = pneg %p51
        %s203 = sand.u32 %s69, 1
        %s204 = scalar_lea.sflag [#allocation5], %s203
        %s205 = sand.u32 %s69, 1
        %s206 = smul.addr %s205, 64
        %s207 = scalar_lea.vmem [#allocation4], %s206
        %p208 = pneg %p82
        %p209 = pneg %p79
        %p210 = pneg %p110
        %p211 = pneg %p107
        %p212 = scmp.lt.s32.totalorder %s23, 0
        %s213 = scalar_select %p212, %s23, 0
        %p214 = scmp.lt.s32.totalorder %s24, 1
        %s215 = scalar_select %p214, %s24, 1
        %s216 = smul.addr %s213, 2
        %s217 = sadd.s32 %s215, %s216
        %s218 = scalar_lea.vmem %s2, %s217
        %s219 = smul.u32 8, %s24
        %s220 = smul.u32 8, %s24
        %p221 = scmp.lt.s32.totalorder %s23, 0
        %s222 = scalar_select %p221, %s23, 0
        %p223 = scmp.lt.s32.totalorder %s24, 1
        %s224 = scalar_select %p223, %s24, 1
        %s225 = smul.addr %s222, 2
        %s226 = sadd.s32 %s224, %s225
        %s227 = scalar_lea.vmem %s2, %s226
        %s228 = smul.u32 %s24, 4
        %v229 = vld [vmem:[%s182] sm:$0xff]
        %v230 = vld [vmem:[%s182 + $0x8] sm:$0xff]
        %v231 = vld [vmem:[%s191] sm:$0xff]
        %v232 = vld [vmem:[%s191 + $0x8] sm:$0xff]
        %v233 = vsub.f32 %v229, %v231
        %v234 = vsub.f32 %v230, %v232
        %v235 = vmul.f32 %v233, %v233
        %v236 = vmul.f32 %v234, %v234
        %v237 = vadd.f32 %v235, %v236
        %238 = vadd.xlane.f32.xlu0 %v237
        %v239 = vpop.xlane.xlu0 %238
        %v240 = vrot.slane %v239, 4
        %v241 = vadd.f32 %v239, %v240
        %v242 = vrot.slane %v241, 2
        %v243 = vadd.f32 %v241, %v242
        %v244 = vrot.slane %v243, 1
        %v245 = vadd.f32 %v243, %v244
        %s246 = vtos %v245
        %s247 = sadd.s32 %s228, 1
        %s248 = scvt.s32.f32 %s247
        %s249 = smul.f32 %s248, 1.3563368e-05
        %s250 = smul.f32 %s249, %s246
        %s251 = sadd.f32 %s250, 0.0
        %v252 = vld [vmem:[%s182 + $0x10] sm:$0xff]
        %v253 = vld [vmem:[%s182 + $0x18] sm:$0xff]
        %v254 = vld [vmem:[%s191 + $0x10] sm:$0xff]
        %v255 = vld [vmem:[%s191 + $0x18] sm:$0xff]
        %v256 = vsub.f32 %v252, %v254
        %v257 = vsub.f32 %v253, %v255
        %v258 = vmul.f32 %v256, %v256
        %v259 = vmul.f32 %v257, %v257
        %v260 = vadd.f32 %v258, %v259
        %261 = vadd.xlane.f32.xlu0 %v260
        %v262 = vpop.xlane.xlu0 %261
        %v263 = vrot.slane %v262, 4
        %v264 = vadd.f32 %v262, %v263
        %v265 = vrot.slane %v264, 2
        %v266 = vadd.f32 %v264, %v265
        %v267 = vrot.slane %v266, 1
        %v268 = vadd.f32 %v266, %v267
        %s269 = vtos %v268
        %s270 = sadd.s32 %s228, 2
        %s271 = scvt.s32.f32 %s270
        %s272 = smul.f32 %s271, 1.3563368e-05
        %s273 = smul.f32 %s272, %s269
        %s274 = sadd.f32 %s251, %s273
        %v275 = vld [vmem:[%s182 + $0x20] sm:$0xff]
        %v276 = vld [vmem:[%s182 + $0x28] sm:$0xff]
        %v277 = vld [vmem:[%s191 + $0x20] sm:$0xff]
        %v278 = vld [vmem:[%s191 + $0x28] sm:$0xff]
        %v279 = vsub.f32 %v275, %v277
        %v280 = vsub.f32 %v276, %v278
        %v281 = vmul.f32 %v279, %v279
        %v282 = vmul.f32 %v280, %v280
        %v283 = vadd.f32 %v281, %v282
        %284 = vadd.xlane.f32.xlu0 %v283
        %v285 = vpop.xlane.xlu0 %284
        %v286 = vrot.slane %v285, 4
        %v287 = vadd.f32 %v285, %v286
        %v288 = vrot.slane %v287, 2
        %v289 = vadd.f32 %v287, %v288
        %v290 = vrot.slane %v289, 1
        %v291 = vadd.f32 %v289, %v290
        %s292 = vtos %v291
        %s293 = sadd.s32 %s228, 3
        %s294 = scvt.s32.f32 %s293
        %s295 = smul.f32 %s294, 1.3563368e-05
        %s296 = smul.f32 %s295, %s292
        %s297 = sadd.f32 %s274, %s296
        %v298 = vld [vmem:[%s182 + $0x30] sm:$0xff]
        %v299 = vld [vmem:[%s182 + $0x38] sm:$0xff]
        %v300 = vld [vmem:[%s191 + $0x30] sm:$0xff]
        %v301 = vld [vmem:[%s191 + $0x38] sm:$0xff]
        %v302 = vsub.f32 %v298, %v300
        %v303 = vsub.f32 %v299, %v301
        %v304 = vmul.f32 %v302, %v302
        %v305 = vmul.f32 %v303, %v303
        %v306 = vadd.f32 %v304, %v305
        %307 = vadd.xlane.f32.xlu0 %v306
        %v308 = vpop.xlane.xlu0 %307
        %v309 = vrot.slane %v308, 4
        %v310 = vadd.f32 %v308, %v309
        %v311 = vrot.slane %v310, 2
        %v312 = vadd.f32 %v310, %v311
        %v313 = vrot.slane %v312, 1
        %v314 = vadd.f32 %v312, %v313
        %s315 = vtos %v314
        %s316 = sadd.s32 %s228, 4
        %s317 = scvt.s32.f32 %s316
        %s318 = smul.f32 %s317, 1.3563368e-05
        %s319 = smul.f32 %s318, %s315
        %s320 = sadd.f32 %s297, %s319
        %v321 = vstv %s320
        %vm322 = vcmask 0
        %323 = vst.msk [vmem:[%s227] sm:$0x1] %vm322, %v321
        %p324 = scmp.lt.s32.totalorder %s23, 0
        %s325 = scalar_select %p324, %s23, 0
        %p326 = scmp.lt.s32.totalorder %s24, 1
        %s327 = scalar_select %p326, %s24, 1
        %s328 = smul.addr %s325, 2
        %s329 = sadd.s32 %s327, %s328
        %s330 = scalar_lea.vmem %s2, %s329
        // Predicated region
        $region37: #{tpu_custom_call.1} parent=27 // pred_check
          %p331 = pneg %p107
        $region38: #{tpu_custom_call.1} parent=27 // pred_check_branch
          %333 = sbr.rel (%p331) target = $region40
        $region39: #{tpu_custom_call.1} parent=27 // pred_region
          _
        $region40: #{tpu_custom_call.1} parent=27 // pred_fallthru
          _
      $region28: #{tpu_custom_call.1} parent=5 // pred_fallthru
        _
      %p334 = scmp.le.s32.totalorder 2, %s14
      // Predicated region
      $region41: #{tpu_custom_call.1} parent=5 // pred_check
        %p335 = pneg %p334
      $region42: #{tpu_custom_call.1} parent=5 // pred_check_branch
        %337 = sbr.rel (%p335) target = $region44
      $region43: #{tpu_custom_call.1} parent=5 // pred_region
        %s338 = ssub.s32 %s14, 2
        // Predicated region
        $region45: #{tpu_custom_call.1} parent=43 // pred_check
          %p339 = pneg %p113
        $region46: #{tpu_custom_call.1} parent=43 // pred_check_branch
          %341 = sbr.rel (%p339) target = $region48
        $region47: #{tpu_custom_call.1} parent=43 // pred_region
          %p342 = scmp.lt.s32.totalorder %s25, 0
          %s343 = scalar_select %p342, %s25, 0
          %p344 = scmp.lt.s32.totalorder %s26, 1
          %s345 = scalar_select %p344, %s26, 1
          %s346 = smul.addr %s343, 2
          %s347 = sadd.s32 %s345, %s346
          %s348 = scalar_lea.vmem %s2, %s347
        $region48: #{tpu_custom_call.1} parent=43 // pred_fallthru
          _
      $region44: #{tpu_custom_call.1} parent=5 // pred_fallthru
        _
    $region6: #{tpu_custom_call.1} parent=1 // loop_footer
      %s18 = sadd.s32 1, %s14
    $region7: #{tpu_custom_call.1} parent=1 // loop_footer_branch
      %13 = sbr.rel target = $region3
    $region8: #{tpu_custom_call.1} parent=1 // loop_exit
      _
    %349 = vsyncpa [#allocation3], 1
    %s350 = scalar_lea.sflag [#allocation3], 1
    %351 = vsyncpa %s350, 1
    %352 = vsyncpa [#allocation5], 1
    %s353 = scalar_lea.sflag [#allocation5], 1
    %354 = vsyncpa %s353, 1

</llo_original>
